<compile_context>
chip_gen: v5e
topology: v5e:2x2
jax: 0.10.0
libtpu: 0.0.40
codegen_flags: <defaults>
</compile_context>

<pallas_src>
import functools

import jax
import jax.numpy as jnp
from jax import lax
from jax.experimental import pallas as pl
from jax.experimental.pallas import tpu as pltpu

KERNEL_SIZE = 3          # stands in for sys.argv[2] of the original script (odd K)
COUT = 3
EPS = 1e-5


def conv_stats_kernel(x_ref, w_ref, y_ref, st_ref, xpad_ref, *, K, W):
    """Pass 1: Conv2d(1->COUT, KxK, 'same') on one batch tile + BN partial sums.

    x_ref   : (Nt, 1, H*W)       f32 VMEM  flattened grayscale tile (lane-dense)
    w_ref   : (COUT*K*K,)        f32 SMEM  conv weights (OIHW, I=1, flattened)
    y_ref   : (Nt, COUT, H*W)    f32 VMEM  pre-BN conv output (lane-dense)
    st_ref  : (1, 2*COUT, 128)   f32 VMEM  rows [0,COUT): sum, [COUT,2*COUT): sumsq
    xpad_ref: (Nt, H*W + 2*PAD)  f32 VMEM  scratch; zero halo handles row under/overrun
    """
    p = K // 2
    nt, _, hw = x_ref.shape
    pad = p * (W + 1)

    # Stage the tile into the zero-halo scratch.  The halo is re-zeroed every grid
    # step: the scratch is per-core persistent and the "parallel" batch axis may be
    # split across TensorCores.
    if pad > 0:
        xpad_ref[:, :pad] = jnp.zeros((nt, pad), jnp.float32)
        xpad_ref[:, pad + hw:] = jnp.zeros((nt, pad), jnp.float32)
    xpad_ref[:, pad:pad + hw] = x_ref[:, 0, :]

    # Column-validity masks for the flattened layout (kill row-wrap lanes).  One
    # mask per horizontal offset, built once and shared by every kh and channel.
    col = lax.broadcasted_iota(jnp.int32, (1, hw), 1) % W
    masks = {}
    for kw in range(K):
        dj = kw - p
        if dj != 0:
            masks[kw] = ((col + dj >= 0) & (col + dj < W)).astype(jnp.float32)

    # Shifted-window convolution on the VPU: each of the K*K windows is read from
    # the scratch exactly once and reused for all COUT output channels.
    accs = [jnp.zeros((nt, hw), jnp.float32) for _ in range(COUT)]
    for kh in range(K):
        for kw in range(K):
            start = kh * W + kw
            win = xpad_ref[:, start:start + hw]
            if kw in masks:
                win = win * masks[kw]
            for co in range(COUT):
                accs[co] = accs[co] + w_ref[co * K * K + kh * K + kw] * win

    # Note: the conv bias is omitted on purpose -- train-mode BatchNorm subtracts
    # the per-channel batch mean, so a constant bias cancels exactly.
    for co in range(COUT):
        a = accs[co]
        y_ref[:, co, :] = a
        st_ref[:, co, :] = jnp.full((1, 128), jnp.sum(a), dtype=jnp.float32)
        st_ref[:, COUT + co, :] = jnp.full((1, 128), jnp.sum(a * a), dtype=jnp.float32)


def bn_tanh_kernel(y_ref, scale_ref, shift_ref, o_ref):
    """Pass 2: folded BatchNorm affine (y*s + t) + tanh, lane-dense stores.

    y_ref    : (Nt, COUT, H*W) f32 VMEM   pre-BN conv output tile
    scale_ref: (COUT,)         f32 SMEM   gamma / sqrt(var + eps)
    shift_ref: (COUT,)         f32 SMEM   beta - mean * scale
    o_ref    : (Nt, COUT, H*W) f32 VMEM
    """
    for co in range(COUT):
        o_ref[:, co, :] = jnp.tanh(y_ref[:, co, :] * scale_ref[co] + shift_ref[co])


def _pick_batch_tile(n, hw):
    # Per-sample working set per grid step (input + COUT conv-out + halo scratch +
    # COUT accumulators), x2 for the double-buffered pipeline.  Cap it well below
    # v5e's 16 MiB scoped-VMEM default and v7x's 64 MiB physical VMEM.
    per_sample_bytes = 4 * hw * (2 * COUT + 4)
    nt = max(1, min(n, (4 << 20) // max(per_sample_bytes, 1)))
    if n > 1:
        nt = min(nt, (n + 1) // 2)   # >= 2 grid steps so a v7x megacore can split the axis
    while n % nt:
        nt -= 1
    return nt


def net1layer_bn(x_nchw, w_oihw, bias, gamma, beta, *, K=KERNEL_SIZE):
    """x_nchw: (N, 1, H, W) f32.  Returns (N, COUT, H, W) f32 (NCHW), matching
    Conv2d(1,COUT,K,padding=K//2) -> BatchNorm2d(COUT, training forward) -> tanh."""
    del bias  # conv bias cancels exactly against the train-mode BN batch mean
    N, Cin, H, W = x_nchw.shape
    assert Cin == 1 and K % 2 == 1
    HW = H * W
    pad = (K // 2) * (W + 1)

    x_flat = x_nchw.reshape(N, 1, HW).astype(jnp.float32)     # free reshape, lane-dense
    w_flat = w_oihw.reshape(-1).astype(jnp.float32)           # (COUT*K*K,)

    nt = _pick_batch_tile(N, HW)
    n_tiles = N // nt

    smem = pl.BlockSpec(memory_space=pltpu.MemorySpace.SMEM)
    parallel = pltpu.CompilerParams(dimension_semantics=("parallel",))

    # ---- pass 1: conv + per-tile BN partial sums -----------------------------
    conv_kernel = functools.partial(conv_stats_kernel, K=K, W=W)
    y_conv, stats = pl.pallas_call(
        conv_kernel,
        out_shape=(jax.ShapeDtypeStruct((N, COUT, HW), jnp.float32),
                   jax.ShapeDtypeStruct((n_tiles, 2 * COUT, 128), jnp.float32)),
        grid_spec=pltpu.PrefetchScalarGridSpec(
            num_scalar_prefetch=0,
            grid=(n_tiles,),
            in_specs=[pl.BlockSpec((nt, 1, HW), lambda i: (i, 0, 0)), smem],
            out_specs=[pl.BlockSpec((nt, COUT, HW), lambda i: (i, 0, 0)),
                       pl.BlockSpec((1, 2 * COUT, 128), lambda i: (i, 0, 0))],
            scratch_shapes=[pltpu.VMEM((nt, HW + 2 * pad), jnp.float32)]),
        compiler_params=parallel,
    )(x_flat, w_flat)

    # ---- combine per-tile (sum, sumsq) partials -> folded BN scale/shift -----
    # (COUT-sized arithmetic between the two passes, outside the kernels)
    cnt = jnp.float32(N * HW)
    s1 = stats[:, :COUT, 0].sum(axis=0)
    s2 = stats[:, COUT:, 0].sum(axis=0)
    mean = s1 / cnt
    var = jnp.maximum(s2 / cnt - mean * mean, 0.0)
    scale = gamma.astype(jnp.float32) * lax.rsqrt(var + EPS)
    shift = beta.astype(jnp.float32) - mean * scale

    # ---- pass 2: normalize + tanh ---------------------------------------------
    out_flat = pl.pallas_call(
        bn_tanh_kernel,
        out_shape=jax.ShapeDtypeStruct((N, COUT, HW), jnp.float32),
        grid_spec=pltpu.PrefetchScalarGridSpec(
            num_scalar_prefetch=0,
            grid=(n_tiles,),
            in_specs=[pl.BlockSpec((nt, COUT, HW), lambda i: (i, 0, 0)), smem, smem],
            out_specs=pl.BlockSpec((nt, COUT, HW), lambda i: (i, 0, 0))),
        compiler_params=parallel,
    )(y_conv, scale, shift)

    return out_flat.reshape(N, COUT, H, W)


def _reference(x, w, b, gamma, beta, *, K=KERNEL_SIZE):
    pad = K // 2
    y = lax.conv_general_dilated(
        x, w, window_strides=(1, 1), padding=[(pad, pad), (pad, pad)],
        dimension_numbers=("NCHW", "OIHW", "NCHW"),
    ) + b.reshape(1, COUT, 1, 1)
    mean = y.mean(axis=(0, 2, 3), keepdims=True)
    var = ((y - mean) ** 2).mean(axis=(0, 2, 3), keepdims=True)
    y = (y - mean) / jnp.sqrt(var + EPS)
    y = y * gamma.reshape(1, COUT, 1, 1) + beta.reshape(1, COUT, 1, 1)
    return jnp.tanh(y)


if __name__ == "__main__":
    key = jax.random.PRNGKey(0)
    k_x, k_w, k_b = jax.random.split(key, 3)

    N, H, W = 2, 16, 16
    x = jax.random.normal(k_x, (N, 1, H, W), dtype=jnp.float32)

    # Deterministic parameter init (synthetic; BN gamma/beta at PyTorch defaults).
    fan_in = 1 * KERNEL_SIZE * KERNEL_SIZE
    bound = 1.0 / (fan_in ** 0.5)
    w = jax.random.uniform(k_w, (COUT, 1, KERNEL_SIZE, KERNEL_SIZE),
                           minval=-bound, maxval=bound, dtype=jnp.float32)
    b = jax.random.uniform(k_b, (COUT,), minval=-bound, maxval=bound,
                           dtype=jnp.float32)
    gamma = jnp.ones((COUT,), jnp.float32)
    beta = jnp.zeros((COUT,), jnp.float32)

    out = jax.block_until_ready(net1layer_bn(x, w, b, gamma, beta))

    ref = _reference(x, w, b, gamma, beta)
    assert out.shape == (N, COUT, H, W)
    # tolerance covers the one-pass (sum, sumsq) variance and the folded BN affine
    assert jnp.allclose(out, ref, atol=1e-4, rtol=1e-4), "mismatch vs JAX reference"

    print("KERNEL_OK")
</pallas_src>

<mosaic_0001>
module attributes {stable_mosaic.version = 11 : i64} {
  func.func @conv_stats_kernel(%arg0: i32, %arg1: memref<1x1x256xf32, #tpu.memory_space<vmem>>, %arg2: memref<27xf32, #tpu.memory_space<smem>>, %arg3: memref<1x3x256xf32, #tpu.memory_space<vmem>>, %arg4: memref<1x6x128xf32, #tpu.memory_space<vmem>>, %arg5: memref<1x290xf32, #tpu.memory_space<vmem>>) attributes {dimension_semantics = [#tpu.dimension_semantics<parallel>], iteration_bounds = array<i64: 2>, scalar_prefetch = 0 : i64, scratch_operands = 1 : i64, tpu.core_type = #tpu.core_type<tc>, window_params = [{transform_indices = @transform_0, window_bounds = array<i64: 1, 1, 256>}, {transform_indices = @transform_1, window_bounds = array<i64: 27>}, {transform_indices = @transform_2, window_bounds = array<i64: 1, 3, 256>}, {transform_indices = @transform_3, window_bounds = array<i64: 1, 6, 128>}]} {
    %cst = arith.constant 0.000000e+00 : f32
    %0 = vector.broadcast %cst : f32 to vector<1x17xf32>
    %c0 = arith.constant 0 : index
    %c0_0 = arith.constant 0 : index
    %1 = vector.load %arg5[%c0, %c0_0] : memref<1x290xf32, #tpu.memory_space<vmem>>, vector<1x17xf32>
    tpu.vector_store %arg5[%c0, %c0_0], %0 {strides = array<i32>} : memref<1x290xf32, #tpu.memory_space<vmem>>, vector<1x17xf32>,
    %cst_1 = arith.constant 0.000000e+00 : f32
    %2 = vector.broadcast %cst_1 : f32 to vector<1x17xf32>
    %c0_2 = arith.constant 0 : index
    %c273 = arith.constant 273 : index
    %3 = vector.load %arg5[%c0_2, %c273] : memref<1x290xf32, #tpu.memory_space<vmem>>, vector<1x17xf32>
    tpu.vector_store %arg5[%c0_2, %c273], %2 {strides = array<i32>} : memref<1x290xf32, #tpu.memory_space<vmem>>, vector<1x17xf32>,
    %c0_3 = arith.constant 0 : index
    %c0_4 = arith.constant 0 : index
    %c0_5 = arith.constant 0 : index
    %4 = vector.load %arg1[%c0_3, %c0_4, %c0_5] : memref<1x1x256xf32, #tpu.memory_space<vmem>>, vector<1x1x256xf32>
    %5 = vector.shape_cast %4 : vector<1x1x256xf32> to vector<1x256xf32>
    %c0_6 = arith.constant 0 : index
    %c17 = arith.constant 17 : index
    %6 = vector.load %arg5[%c0_6, %c17] : memref<1x290xf32, #tpu.memory_space<vmem>>, vector<1x256xf32>
    tpu.vector_store %arg5[%c0_6, %c17], %5 {strides = array<i32>} : memref<1x290xf32, #tpu.memory_space<vmem>>, vector<1x256xf32>,
    %7 = tpu.iota {dimensions = array<i32: 1>} : vector<1x256xi32>
    %c16_i32 = arith.constant 16 : i32
    %c0_i32 = arith.constant 0 : i32
    %8 = arith.cmpi eq, %c16_i32, %c0_i32 : i32
    %c1_i32 = arith.constant 1 : i32
    %9 = arith.select %8, %c1_i32, %c16_i32 : i32
    %10 = vector.broadcast %9 : i32 to vector<1x256xi32>
    %11 = arith.remsi %7, %10 : vector<1x256xi32>
    %c0_i32_7 = arith.constant 0 : i32
    %12 = vector.broadcast %c0_i32_7 : i32 to vector<1x256xi32>
    %13 = arith.cmpi ne, %11, %12 : vector<1x256xi32>
    %c0_i32_8 = arith.constant 0 : i32
    %14 = vector.broadcast %c0_i32_8 : i32 to vector<1x256xi32>
    %15 = arith.cmpi slt, %11, %14 : vector<1x256xi32>
    %c0_i32_9 = arith.constant 0 : i32
    %16 = arith.cmpi slt, %9, %c0_i32_9 : i32
    %17 = vector.broadcast %16 : i1 to vector<1x256xi1>
    %18 = vector.broadcast %17 : vector<1x256xi1> to vector<1x256xi1>
    %19 = arith.xori %15, %18 : vector<1x256xi1>
    %20 = arith.andi %19, %13 : vector<1x256xi1>
    %21 = vector.broadcast %9 : i32 to vector<1x256xi32>
    %22 = arith.addi %11, %21 : vector<1x256xi32>
    %23 = arith.select %20, %22, %11 : vector<1x256xi1>, vector<1x256xi32>
    %c-1_i32 = arith.constant -1 : i32
    %24 = vector.broadcast %c-1_i32 : i32 to vector<1x256xi32>
    %25 = arith.addi %23, %24 : vector<1x256xi32>
    %c0_i32_10 = arith.constant 0 : i32
    %26 = vector.broadcast %c0_i32_10 : i32 to vector<1x256xi32>
    %27 = arith.cmpi sge, %25, %26 : vector<1x256xi32>
    %c-1_i32_11 = arith.constant -1 : i32
    %28 = vector.broadcast %c-1_i32_11 : i32 to vector<1x256xi32>
    %29 = arith.addi %23, %28 : vector<1x256xi32>
    %c16_i32_12 = arith.constant 16 : i32
    %30 = vector.broadcast %c16_i32_12 : i32 to vector<1x256xi32>
    %31 = arith.cmpi slt, %29, %30 : vector<1x256xi32>
    %32 = arith.andi %27, %31 : vector<1x256xi1>
    %33 = arith.extui %32 : vector<1x256xi1> to vector<1x256xi32>
    %34 = arith.sitofp %33 : vector<1x256xi32> to vector<1x256xf32>
    %c1_i32_13 = arith.constant 1 : i32
    %35 = vector.broadcast %c1_i32_13 : i32 to vector<1x256xi32>
    %36 = arith.addi %23, %35 : vector<1x256xi32>
    %c0_i32_14 = arith.constant 0 : i32
    %37 = vector.broadcast %c0_i32_14 : i32 to vector<1x256xi32>
    %38 = arith.cmpi sge, %36, %37 : vector<1x256xi32>
    %c1_i32_15 = arith.constant 1 : i32
    %39 = vector.broadcast %c1_i32_15 : i32 to vector<1x256xi32>
    %40 = arith.addi %23, %39 : vector<1x256xi32>
    %c16_i32_16 = arith.constant 16 : i32
    %41 = vector.broadcast %c16_i32_16 : i32 to vector<1x256xi32>
    %42 = arith.cmpi slt, %40, %41 : vector<1x256xi32>
    %43 = arith.andi %38, %42 : vector<1x256xi1>
    %44 = arith.extui %43 : vector<1x256xi1> to vector<1x256xi32>
    %45 = arith.sitofp %44 : vector<1x256xi32> to vector<1x256xf32>
    %cst_17 = arith.constant 0.000000e+00 : f32
    %46 = vector.broadcast %cst_17 : f32 to vector<1x256xf32>
    %cst_18 = arith.constant 0.000000e+00 : f32
    %47 = vector.broadcast %cst_18 : f32 to vector<1x256xf32>
    %cst_19 = arith.constant 0.000000e+00 : f32
    %48 = vector.broadcast %cst_19 : f32 to vector<1x256xf32>
    %c0_20 = arith.constant 0 : index
    %c0_21 = arith.constant 0 : index
    %49 = vector.load %arg5[%c0_20, %c0_21] : memref<1x290xf32, #tpu.memory_space<vmem>>, vector<1x256xf32>
    %50 = arith.mulf %49, %34 : vector<1x256xf32>
    %c0_22 = arith.constant 0 : index
    %51 = memref.load %arg2[%c0_22] : memref<27xf32, #tpu.memory_space<smem>>
    %52 = vector.broadcast %51 : f32 to vector<1x256xf32>
    %53 = arith.mulf %52, %50 : vector<1x256xf32>
    %54 = arith.addf %46, %53 : vector<1x256xf32>
    %c9 = arith.constant 9 : index
    %55 = memref.load %arg2[%c9] : memref<27xf32, #tpu.memory_space<smem>>
    %56 = vector.broadcast %55 : f32 to vector<1x256xf32>
    %57 = arith.mulf %56, %50 : vector<1x256xf32>
    %58 = arith.addf %47, %57 : vector<1x256xf32>
    %c18 = arith.constant 18 : index
    %59 = memref.load %arg2[%c18] : memref<27xf32, #tpu.memory_space<smem>>
    %60 = vector.broadcast %59 : f32 to vector<1x256xf32>
    %61 = arith.mulf %60, %50 : vector<1x256xf32>
    %62 = arith.addf %48, %61 : vector<1x256xf32>
    %c0_23 = arith.constant 0 : index
    %c1 = arith.constant 1 : index
    %63 = vector.load %arg5[%c0_23, %c1] : memref<1x290xf32, #tpu.memory_space<vmem>>, vector<1x256xf32>
    %c1_24 = arith.constant 1 : index
    %64 = memref.load %arg2[%c1_24] : memref<27xf32, #tpu.memory_space<smem>>
    %65 = vector.broadcast %64 : f32 to vector<1x256xf32>
    %66 = arith.mulf %65, %63 : vector<1x256xf32>
    %67 = arith.addf %54, %66 : vector<1x256xf32>
    %c10 = arith.constant 10 : index
    %68 = memref.load %arg2[%c10] : memref<27xf32, #tpu.memory_space<smem>>
    %69 = vector.broadcast %68 : f32 to vector<1x256xf32>
    %70 = arith.mulf %69, %63 : vector<1x256xf32>
    %71 = arith.addf %58, %70 : vector<1x256xf32>
    %c19 = arith.constant 19 : index
    %72 = memref.load %arg2[%c19] : memref<27xf32, #tpu.memory_space<smem>>
    %73 = vector.broadcast %72 : f32 to vector<1x256xf32>
    %74 = arith.mulf %73, %63 : vector<1x256xf32>
    %75 = arith.addf %62, %74 : vector<1x256xf32>
    %c0_25 = arith.constant 0 : index
    %c2 = arith.constant 2 : index
    %76 = vector.load %arg5[%c0_25, %c2] : memref<1x290xf32, #tpu.memory_space<vmem>>, vector<1x256xf32>
    %77 = arith.mulf %76, %45 : vector<1x256xf32>
    %c2_26 = arith.constant 2 : index
    %78 = memref.load %arg2[%c2_26] : memref<27xf32, #tpu.memory_space<smem>>
    %79 = vector.broadcast %78 : f32 to vector<1x256xf32>
    %80 = arith.mulf %79, %77 : vector<1x256xf32>
    %81 = arith.addf %67, %80 : vector<1x256xf32>
    %c11 = arith.constant 11 : index
    %82 = memref.load %arg2[%c11] : memref<27xf32, #tpu.memory_space<smem>>
    %83 = vector.broadcast %82 : f32 to vector<1x256xf32>
    %84 = arith.mulf %83, %77 : vector<1x256xf32>
    %85 = arith.addf %71, %84 : vector<1x256xf32>
    %c20 = arith.constant 20 : index
    %86 = memref.load %arg2[%c20] : memref<27xf32, #tpu.memory_space<smem>>
    %87 = vector.broadcast %86 : f32 to vector<1x256xf32>
    %88 = arith.mulf %87, %77 : vector<1x256xf32>
    %89 = arith.addf %75, %88 : vector<1x256xf32>
    %c0_27 = arith.constant 0 : index
    %c16 = arith.constant 16 : index
    %90 = vector.load %arg5[%c0_27, %c16] : memref<1x290xf32, #tpu.memory_space<vmem>>, vector<1x256xf32>
    %91 = arith.mulf %90, %34 : vector<1x256xf32>
    %c3 = arith.constant 3 : index
    %92 = memref.load %arg2[%c3] : memref<27xf32, #tpu.memory_space<smem>>
    %93 = vector.broadcast %92 : f32 to vector<1x256xf32>
    %94 = arith.mulf %93, %91 : vector<1x256xf32>
    %95 = arith.addf %81, %94 : vector<1x256xf32>
    %c12 = arith.constant 12 : index
    %96 = memref.load %arg2[%c12] : memref<27xf32, #tpu.memory_space<smem>>
    %97 = vector.broadcast %96 : f32 to vector<1x256xf32>
    %98 = arith.mulf %97, %91 : vector<1x256xf32>
    %99 = arith.addf %85, %98 : vector<1x256xf32>
    %c21 = arith.constant 21 : index
    %100 = memref.load %arg2[%c21] : memref<27xf32, #tpu.memory_space<smem>>
    %101 = vector.broadcast %100 : f32 to vector<1x256xf32>
    %102 = arith.mulf %101, %91 : vector<1x256xf32>
    %103 = arith.addf %89, %102 : vector<1x256xf32>
    %c0_28 = arith.constant 0 : index
    %c17_29 = arith.constant 17 : index
    %104 = vector.load %arg5[%c0_28, %c17_29] : memref<1x290xf32, #tpu.memory_space<vmem>>, vector<1x256xf32>
    %c4 = arith.constant 4 : index
    %105 = memref.load %arg2[%c4] : memref<27xf32, #tpu.memory_space<smem>>
    %106 = vector.broadcast %105 : f32 to vector<1x256xf32>
    %107 = arith.mulf %106, %104 : vector<1x256xf32>
    %108 = arith.addf %95, %107 : vector<1x256xf32>
    %c13 = arith.constant 13 : index
    %109 = memref.load %arg2[%c13] : memref<27xf32, #tpu.memory_space<smem>>
    %110 = vector.broadcast %109 : f32 to vector<1x256xf32>
    %111 = arith.mulf %110, %104 : vector<1x256xf32>
    %112 = arith.addf %99, %111 : vector<1x256xf32>
    %c22 = arith.constant 22 : index
    %113 = memref.load %arg2[%c22] : memref<27xf32, #tpu.memory_space<smem>>
    %114 = vector.broadcast %113 : f32 to vector<1x256xf32>
    %115 = arith.mulf %114, %104 : vector<1x256xf32>
    %116 = arith.addf %103, %115 : vector<1x256xf32>
    %c0_30 = arith.constant 0 : index
    %c18_31 = arith.constant 18 : index
    %117 = vector.load %arg5[%c0_30, %c18_31] : memref<1x290xf32, #tpu.memory_space<vmem>>, vector<1x256xf32>
    %118 = arith.mulf %117, %45 : vector<1x256xf32>
    %c5 = arith.constant 5 : index
    %119 = memref.load %arg2[%c5] : memref<27xf32, #tpu.memory_space<smem>>
    %120 = vector.broadcast %119 : f32 to vector<1x256xf32>
    %121 = arith.mulf %120, %118 : vector<1x256xf32>
    %122 = arith.addf %108, %121 : vector<1x256xf32>
    %c14 = arith.constant 14 : index
    %123 = memref.load %arg2[%c14] : memref<27xf32, #tpu.memory_space<smem>>
    %124 = vector.broadcast %123 : f32 to vector<1x256xf32>
    %125 = arith.mulf %124, %118 : vector<1x256xf32>
    %126 = arith.addf %112, %125 : vector<1x256xf32>
    %c23 = arith.constant 23 : index
    %127 = memref.load %arg2[%c23] : memref<27xf32, #tpu.memory_space<smem>>
    %128 = vector.broadcast %127 : f32 to vector<1x256xf32>
    %129 = arith.mulf %128, %118 : vector<1x256xf32>
    %130 = arith.addf %116, %129 : vector<1x256xf32>
    %c0_32 = arith.constant 0 : index
    %c32 = arith.constant 32 : index
    %131 = vector.load %arg5[%c0_32, %c32] : memref<1x290xf32, #tpu.memory_space<vmem>>, vector<1x256xf32>
    %132 = arith.mulf %131, %34 : vector<1x256xf32>
    %c6 = arith.constant 6 : index
    %133 = memref.load %arg2[%c6] : memref<27xf32, #tpu.memory_space<smem>>
    %134 = vector.broadcast %133 : f32 to vector<1x256xf32>
    %135 = arith.mulf %134, %132 : vector<1x256xf32>
    %136 = arith.addf %122, %135 : vector<1x256xf32>
    %c15 = arith.constant 15 : index
    %137 = memref.load %arg2[%c15] : memref<27xf32, #tpu.memory_space<smem>>
    %138 = vector.broadcast %137 : f32 to vector<1x256xf32>
    %139 = arith.mulf %138, %132 : vector<1x256xf32>
    %140 = arith.addf %126, %139 : vector<1x256xf32>
    %c24 = arith.constant 24 : index
    %141 = memref.load %arg2[%c24] : memref<27xf32, #tpu.memory_space<smem>>
    %142 = vector.broadcast %141 : f32 to vector<1x256xf32>
    %143 = arith.mulf %142, %132 : vector<1x256xf32>
    %144 = arith.addf %130, %143 : vector<1x256xf32>
    %c0_33 = arith.constant 0 : index
    %c33 = arith.constant 33 : index
    %145 = vector.load %arg5[%c0_33, %c33] : memref<1x290xf32, #tpu.memory_space<vmem>>, vector<1x256xf32>
    %c7 = arith.constant 7 : index
    %146 = memref.load %arg2[%c7] : memref<27xf32, #tpu.memory_space<smem>>
    %147 = vector.broadcast %146 : f32 to vector<1x256xf32>
    %148 = arith.mulf %147, %145 : vector<1x256xf32>
    %149 = arith.addf %136, %148 : vector<1x256xf32>
    %c16_34 = arith.constant 16 : index
    %150 = memref.load %arg2[%c16_34] : memref<27xf32, #tpu.memory_space<smem>>
    %151 = vector.broadcast %150 : f32 to vector<1x256xf32>
    %152 = arith.mulf %151, %145 : vector<1x256xf32>
    %153 = arith.addf %140, %152 : vector<1x256xf32>
    %c25 = arith.constant 25 : index
    %154 = memref.load %arg2[%c25] : memref<27xf32, #tpu.memory_space<smem>>
    %155 = vector.broadcast %154 : f32 to vector<1x256xf32>
    %156 = arith.mulf %155, %145 : vector<1x256xf32>
    %157 = arith.addf %144, %156 : vector<1x256xf32>
    %c0_35 = arith.constant 0 : index
    %c34 = arith.constant 34 : index
    %158 = vector.load %arg5[%c0_35, %c34] : memref<1x290xf32, #tpu.memory_space<vmem>>, vector<1x256xf32>
    %159 = arith.mulf %158, %45 : vector<1x256xf32>
    %c8 = arith.constant 8 : index
    %160 = memref.load %arg2[%c8] : memref<27xf32, #tpu.memory_space<smem>>
    %161 = vector.broadcast %160 : f32 to vector<1x256xf32>
    %162 = arith.mulf %161, %159 : vector<1x256xf32>
    %163 = arith.addf %149, %162 : vector<1x256xf32>
    %c17_36 = arith.constant 17 : index
    %164 = memref.load %arg2[%c17_36] : memref<27xf32, #tpu.memory_space<smem>>
    %165 = vector.broadcast %164 : f32 to vector<1x256xf32>
    %166 = arith.mulf %165, %159 : vector<1x256xf32>
    %167 = arith.addf %153, %166 : vector<1x256xf32>
    %c26 = arith.constant 26 : index
    %168 = memref.load %arg2[%c26] : memref<27xf32, #tpu.memory_space<smem>>
    %169 = vector.broadcast %168 : f32 to vector<1x256xf32>
    %170 = arith.mulf %169, %159 : vector<1x256xf32>
    %171 = arith.addf %157, %170 : vector<1x256xf32>
    %c0_37 = arith.constant 0 : index
    %c0_38 = arith.constant 0 : index
    %c0_39 = arith.constant 0 : index
    %172 = vector.load %arg3[%c0_37, %c0_38, %c0_39] : memref<1x3x256xf32, #tpu.memory_space<vmem>>, vector<1x1x256xf32>
    %173 = vector.shape_cast %172 : vector<1x1x256xf32> to vector<1x256xf32>
    %174 = vector.shape_cast %163 : vector<1x256xf32> to vector<1x1x256xf32>
    tpu.vector_store %arg3[%c0_37, %c0_38, %c0_39], %174 {strides = array<i32>} : memref<1x3x256xf32, #tpu.memory_space<vmem>>, vector<1x1x256xf32>,
    %175 = vector.shape_cast %163 : vector<1x256xf32> to vector<1x1x256xf32>
    %cst_40 = arith.constant dense<0.000000e+00> : vector<1xf32>
    %176 = vector.multi_reduction <add>, %175, %cst_40 [1, 2] : vector<1x1x256xf32> to vector<1xf32>
    %177 = vector.shape_cast %176 : vector<1xf32> to vector<1x1x1xf32>
    %178 = vector.extract %177[0, 0, 0] : f32 from vector<1x1x1xf32>
    %179 = vector.broadcast %178 : f32 to vector<1x128xf32>
    %c0_41 = arith.constant 0 : index
    %c0_42 = arith.constant 0 : index
    %c0_43 = arith.constant 0 : index
    %180 = vector.load %arg4[%c0_41, %c0_42, %c0_43] : memref<1x6x128xf32, #tpu.memory_space<vmem>>, vector<1x1x128xf32>
    %181 = vector.shape_cast %180 : vector<1x1x128xf32> to vector<1x128xf32>
    %182 = vector.shape_cast %179 : vector<1x128xf32> to vector<1x1x128xf32>
    tpu.vector_store %arg4[%c0_41, %c0_42, %c0_43], %182 {strides = array<i32>} : memref<1x6x128xf32, #tpu.memory_space<vmem>>, vector<1x1x128xf32>,
    %183 = arith.mulf %163, %163 : vector<1x256xf32>
    %184 = vector.shape_cast %183 : vector<1x256xf32> to vector<1x1x256xf32>
    %cst_44 = arith.constant dense<0.000000e+00> : vector<1xf32>
    %185 = vector.multi_reduction <add>, %184, %cst_44 [1, 2] : vector<1x1x256xf32> to vector<1xf32>
    %186 = vector.shape_cast %185 : vector<1xf32> to vector<1x1x1xf32>
    %187 = vector.extract %186[0, 0, 0] : f32 from vector<1x1x1xf32>
    %188 = vector.broadcast %187 : f32 to vector<1x128xf32>
    %c0_45 = arith.constant 0 : index
    %c3_46 = arith.constant 3 : index
    %c0_47 = arith.constant 0 : index
    %189 = vector.load %arg4[%c0_45, %c3_46, %c0_47] : memref<1x6x128xf32, #tpu.memory_space<vmem>>, vector<1x1x128xf32>
    %190 = vector.shape_cast %189 : vector<1x1x128xf32> to vector<1x128xf32>
    %191 = vector.shape_cast %188 : vector<1x128xf32> to vector<1x1x128xf32>
    tpu.vector_store %arg4[%c0_45, %c3_46, %c0_47], %191 {strides = array<i32>} : memref<1x6x128xf32, #tpu.memory_space<vmem>>, vector<1x1x128xf32>,
    %c0_48 = arith.constant 0 : index
    %c1_49 = arith.constant 1 : index
    %c0_50 = arith.constant 0 : index
    %192 = vector.load %arg3[%c0_48, %c1_49, %c0_50] : memref<1x3x256xf32, #tpu.memory_space<vmem>>, vector<1x1x256xf32>
    %193 = vector.shape_cast %192 : vector<1x1x256xf32> to vector<1x256xf32>
    %194 = vector.shape_cast %167 : vector<1x256xf32> to vector<1x1x256xf32>
    tpu.vector_store %arg3[%c0_48, %c1_49, %c0_50], %194 {strides = array<i32>} : memref<1x3x256xf32, #tpu.memory_space<vmem>>, vector<1x1x256xf32>,
    %195 = vector.shape_cast %167 : vector<1x256xf32> to vector<1x1x256xf32>
    %cst_51 = arith.constant dense<0.000000e+00> : vector<1xf32>
    %196 = vector.multi_reduction <add>, %195, %cst_51 [1, 2] : vector<1x1x256xf32> to vector<1xf32>
    %197 = vector.shape_cast %196 : vector<1xf32> to vector<1x1x1xf32>
    %198 = vector.extract %197[0, 0, 0] : f32 from vector<1x1x1xf32>
    %199 = vector.broadcast %198 : f32 to vector<1x128xf32>
    %c0_52 = arith.constant 0 : index
    %c1_53 = arith.constant 1 : index
    %c0_54 = arith.constant 0 : index
    %200 = vector.load %arg4[%c0_52, %c1_53, %c0_54] : memref<1x6x128xf32, #tpu.memory_space<vmem>>, vector<1x1x128xf32>
    %201 = vector.shape_cast %200 : vector<1x1x128xf32> to vector<1x128xf32>
    %202 = vector.shape_cast %199 : vector<1x128xf32> to vector<1x1x128xf32>
    tpu.vector_store %arg4[%c0_52, %c1_53, %c0_54], %202 {strides = array<i32>} : memref<1x6x128xf32, #tpu.memory_space<vmem>>, vector<1x1x128xf32>,
    %203 = arith.mulf %167, %167 : vector<1x256xf32>
    %204 = vector.shape_cast %203 : vector<1x256xf32> to vector<1x1x256xf32>
    %cst_55 = arith.constant dense<0.000000e+00> : vector<1xf32>
    %205 = vector.multi_reduction <add>, %204, %cst_55 [1, 2] : vector<1x1x256xf32> to vector<1xf32>
    %206 = vector.shape_cast %205 : vector<1xf32> to vector<1x1x1xf32>
    %207 = vector.extract %206[0, 0, 0] : f32 from vector<1x1x1xf32>
    %208 = vector.broadcast %207 : f32 to vector<1x128xf32>
    %c0_56 = arith.constant 0 : index
    %c4_57 = arith.constant 4 : index
    %c0_58 = arith.constant 0 : index
    %209 = vector.load %arg4[%c0_56, %c4_57, %c0_58] : memref<1x6x128xf32, #tpu.memory_space<vmem>>, vector<1x1x128xf32>
    %210 = vector.shape_cast %209 : vector<1x1x128xf32> to vector<1x128xf32>
    %211 = vector.shape_cast %208 : vector<1x128xf32> to vector<1x1x128xf32>
    tpu.vector_store %arg4[%c0_56, %c4_57, %c0_58], %211 {strides = array<i32>} : memref<1x6x128xf32, #tpu.memory_space<vmem>>, vector<1x1x128xf32>,
    %c0_59 = arith.constant 0 : index
    %c2_60 = arith.constant 2 : index
    %c0_61 = arith.constant 0 : index
    %212 = vector.load %arg3[%c0_59, %c2_60, %c0_61] : memref<1x3x256xf32, #tpu.memory_space<vmem>>, vector<1x1x256xf32>
    %213 = vector.shape_cast %212 : vector<1x1x256xf32> to vector<1x256xf32>
    %214 = vector.shape_cast %171 : vector<1x256xf32> to vector<1x1x256xf32>
    tpu.vector_store %arg3[%c0_59, %c2_60, %c0_61], %214 {strides = array<i32>} : memref<1x3x256xf32, #tpu.memory_space<vmem>>, vector<1x1x256xf32>,
    %215 = vector.shape_cast %171 : vector<1x256xf32> to vector<1x1x256xf32>
    %cst_62 = arith.constant dense<0.000000e+00> : vector<1xf32>
    %216 = vector.multi_reduction <add>, %215, %cst_62 [1, 2] : vector<1x1x256xf32> to vector<1xf32>
    %217 = vector.shape_cast %216 : vector<1xf32> to vector<1x1x1xf32>
    %218 = vector.extract %217[0, 0, 0] : f32 from vector<1x1x1xf32>
    %219 = vector.broadcast %218 : f32 to vector<1x128xf32>
    %c0_63 = arith.constant 0 : index
    %c2_64 = arith.constant 2 : index
    %c0_65 = arith.constant 0 : index
    %220 = vector.load %arg4[%c0_63, %c2_64, %c0_65] : memref<1x6x128xf32, #tpu.memory_space<vmem>>, vector<1x1x128xf32>
    %221 = vector.shape_cast %220 : vector<1x1x128xf32> to vector<1x128xf32>
    %222 = vector.shape_cast %219 : vector<1x128xf32> to vector<1x1x128xf32>
    tpu.vector_store %arg4[%c0_63, %c2_64, %c0_65], %222 {strides = array<i32>} : memref<1x6x128xf32, #tpu.memory_space<vmem>>, vector<1x1x128xf32>,
    %223 = arith.mulf %171, %171 : vector<1x256xf32>
    %224 = vector.shape_cast %223 : vector<1x256xf32> to vector<1x1x256xf32>
    %cst_66 = arith.constant dense<0.000000e+00> : vector<1xf32>
    %225 = vector.multi_reduction <add>, %224, %cst_66 [1, 2] : vector<1x1x256xf32> to vector<1xf32>
    %226 = vector.shape_cast %225 : vector<1xf32> to vector<1x1x1xf32>
    %227 = vector.extract %226[0, 0, 0] : f32 from vector<1x1x1xf32>
    %228 = vector.broadcast %227 : f32 to vector<1x128xf32>
    %c0_67 = arith.constant 0 : index
    %c5_68 = arith.constant 5 : index
    %c0_69 = arith.constant 0 : index
    %229 = vector.load %arg4[%c0_67, %c5_68, %c0_69] : memref<1x6x128xf32, #tpu.memory_space<vmem>>, vector<1x1x128xf32>
    %230 = vector.shape_cast %229 : vector<1x1x128xf32> to vector<1x128xf32>
    %231 = vector.shape_cast %228 : vector<1x128xf32> to vector<1x1x128xf32>
    tpu.vector_store %arg4[%c0_67, %c5_68, %c0_69], %231 {strides = array<i32>} : memref<1x6x128xf32, #tpu.memory_space<vmem>>, vector<1x1x128xf32>,
    return
  }
  func.func @transform_0(%arg0: i32) -> (i32, i32, i32) {
    %c0_i32 = arith.constant 0 : i32
    %c0_i32_0 = arith.constant 0 : i32
    %c0_i32_1 = arith.constant 0 : i32
    return %arg0, %c0_i32, %c0_i32_0 : i32, i32, i32
  }
  func.func @transform_1(%arg0: i32) -> i32 {
    %c0_i32 = arith.constant 0 : i32
    %c0_i32_0 = arith.constant 0 : i32
    return %c0_i32 : i32
  }
  func.func @transform_2(%arg0: i32) -> (i32, i32, i32) {
    %c0_i32 = arith.constant 0 : i32
    %c0_i32_0 = arith.constant 0 : i32
    %c0_i32_1 = arith.constant 0 : i32
    return %arg0, %c0_i32, %c0_i32_0 : i32, i32, i32
  }
  func.func @transform_3(%arg0: i32) -> (i32, i32, i32) {
    %c0_i32 = arith.constant 0 : i32
    %c0_i32_0 = arith.constant 0 : i32
    %c0_i32_1 = arith.constant 0 : i32
    return %arg0, %c0_i32, %c0_i32_0 : i32, i32, i32
  }
}

</mosaic_0001>

<llo_original>
// kernel: tpu_custom_call.1
$region0: #{tpu_custom_call.1}
  #allocation0 [shape = 'u32[]', space=smem, size = 0x4, offset = 0x4, fixed_abs, tag = 'smem constant byte address 0x4 - core index']
  #allocation1 [shape = 'u32[72,128]{1,0:T(1,128)}', space=vmem, size = 0x9000, scoped, tag = 'internal scratch']
  #allocation2 [shape = 'f32[1,290]{1,0:T(1,128)}', space=vmem, size = 0x600, scoped, tag = 'scratch operand']
  %s0 = inlined_call_operand.hbm [shape: f32[2,1,256], index: 0, kind: input, shape index: {}]
  %s1 = inlined_call_operand.hbm [shape: f32[27], index: 1, kind: input, shape index: {}]
  %s2 = inlined_call_operand.vmem [shape: f32[2,3,256], index: 2, kind: output, shape index: {0}]
  %s3 = inlined_call_operand.vmem [shape: f32[2,6,128], index: 3, kind: output, shape index: {1}]
  %4 = xla_tuple %s2, %s3
  %s5 = sld [smem:[#allocation0]]
  $region57: #{tpu_custom_call.1} parent=0
    _
  %s7 = ssub.s32 1, %s5
  %s8 = scalar_select 0, %s7, %s5
  $region1: #{tpu_custom_call.1} parent=0
    #allocation3 [shape = 'u8[2048]{0}', space=vmem, size = 0x800, scoped, tag = 'input window, operand 0']
    #allocation4 [shape = 's32[2]{0}', space=sflag, size = 0x8, scoped, tag = 'scoped memory for tpu_custom_call.1']
    #allocation5 [shape = 's32[2]{0}', space=sflag, size = 0x8, scoped, tag = 'scoped memory for tpu_custom_call.1']
    #allocation6 [shape = 'u8[512]{0}', space=smem, size = 0x200, scoped, tag = 'input window, operand 1, single buffered']
    %9 = vsyncpa [#allocation4], 0
    %s10 = scalar_lea.sflag [#allocation4], 1
    %11 = vsyncpa %s10, 0
    %12 = vsyncpa [#allocation5], 0
    loop: start=0, step=1, limit=4
    $region2: #{tpu_custom_call.1} parent=1 // loop_pre_header
      _
    $region3: #{tpu_custom_call.1} parent=1 // loop_header
      %s14 = sphi 0, %s18
      %p15 = scmp.ge.s32.totalorder %s14, 4
      %s24 = sphi 0, %s26
      %s27 = sphi 0, %s24
      %s28 = sphi 0, %s27
      %s44 = sphi 0, %s28
      %s48 = sphi 0, %s48
      %s50 = sphi 0, %s48
      %s51 = sphi 0, %s50
      %s65 = sphi 0, %s51
      %s71 = sphi 0, %s73
      %s74 = sphi 0, %s71
      %s75 = sphi 0, %s74
      %s91 = sphi 0, %s75
      %s97 = sphi 0, %s99
      %s100 = sphi 0, %s97
      %s101 = sphi 0, %s100
      %s117 = sphi 0, %s101
    $region4: #{tpu_custom_call.1} parent=1 // loop_header_branch
      %17 = sbr.rel (%p15) target = $region8
    $region5: #{tpu_custom_call.1} parent=1 // loop_body
      %s19 = ssub.s32 %s14, 1
      %s20 = ssub.s32 %s14, 2
      %s21 = sadd.s32 %s14, 1
      %s22 = ssub.s32 %s14, %s21
      %p23 = scmp.eq.s32.totalorder %s22, 0
      %s25 = sadd.s32 %s24, 1
      %s26 = scalar_select %p23, %s24, %s25
      %p29 = pneg %p23
      %p30 = scmp.eq.s32.totalorder %s14, 1
      %p31 = por %p29, %p30
      %p32 = scmp.ne.s32.totalorder %s24, %s27
      %p33 = scmp.eq.s32.totalorder %s14, 0
      %p34 = por %p32, %p33
      %p35 = scmp.ne.s32.totalorder %s24, %s27
      %p36 = scmp.eq.s32.totalorder %s19, 1
      %p37 = por %p35, %p36
      %p38 = scmp.ne.s32.totalorder %s27, %s28
      %p39 = scmp.eq.s32.totalorder %s19, 0
      %p40 = por %p38, %p39
      %p41 = scmp.ne.s32.totalorder %s27, %s28
      %p42 = scmp.eq.s32.totalorder %s20, 1
      %p43 = por %p41, %p42
      %p45 = scmp.ne.s32.totalorder %s28, %s44
      %p46 = scmp.eq.s32.totalorder %s20, 0
      %p47 = por %p45, %p46
      %s49 = sadd.s32 %s48, 1
      %p52 = scmp.eq.s32.totalorder %s14, 1
      %p53 = scmp.ne.s32.totalorder %s48, %s50
      %p54 = scmp.eq.s32.totalorder %s14, 0
      %p55 = por %p53, %p54
      %p56 = scmp.ne.s32.totalorder %s48, %s50
      %p57 = scmp.eq.s32.totalorder %s19, 1
      %p58 = por %p56, %p57
      %p59 = scmp.ne.s32.totalorder %s50, %s51
      %p60 = scmp.eq.s32.totalorder %s19, 0
      %p61 = por %p59, %p60
      %p62 = scmp.ne.s32.totalorder %s50, %s51
      %p63 = scmp.eq.s32.totalorder %s20, 1
      %p64 = por %p62, %p63
      %p66 = scmp.ne.s32.totalorder %s51, %s65
      %p67 = scmp.eq.s32.totalorder %s20, 0
      %p68 = por %p66, %p67
      %s69 = ssub.s32 %s14, %s21
      %p70 = scmp.eq.s32.totalorder %s69, 0
      %s72 = sadd.s32 %s71, 1
      %s73 = scalar_select %p70, %s71, %s72
      %p76 = pneg %p70
      %p77 = scmp.eq.s32.totalorder %s14, 1
      %p78 = por %p76, %p77
      %p79 = scmp.ne.s32.totalorder %s71, %s74
      %p80 = scmp.eq.s32.totalorder %s14, 0
      %p81 = por %p79, %p80
      %p82 = scmp.ne.s32.totalorder %s71, %s74
      %p83 = scmp.eq.s32.totalorder %s19, 1
      %p84 = por %p82, %p83
      %p85 = scmp.ne.s32.totalorder %s74, %s75
      %p86 = scmp.eq.s32.totalorder %s19, 0
      %p87 = por %p85, %p86
      %p88 = scmp.ne.s32.totalorder %s74, %s75
      %p89 = scmp.eq.s32.totalorder %s20, 1
      %p90 = por %p88, %p89
      %p92 = scmp.ne.s32.totalorder %s75, %s91
      %p93 = scmp.eq.s32.totalorder %s20, 0
      %p94 = por %p92, %p93
      %s95 = ssub.s32 %s14, %s21
      %p96 = scmp.eq.s32.totalorder %s95, 0
      %s98 = sadd.s32 %s97, 1
      %s99 = scalar_select %p96, %s97, %s98
      %p102 = pneg %p96
      %p103 = scmp.eq.s32.totalorder %s14, 1
      %p104 = por %p102, %p103
      %p105 = scmp.ne.s32.totalorder %s97, %s100
      %p106 = scmp.eq.s32.totalorder %s14, 0
      %p107 = por %p105, %p106
      %p108 = scmp.ne.s32.totalorder %s97, %s100
      %p109 = scmp.eq.s32.totalorder %s19, 1
      %p110 = por %p108, %p109
      %p111 = scmp.ne.s32.totalorder %s100, %s101
      %p112 = scmp.eq.s32.totalorder %s19, 0
      %p113 = por %p111, %p112
      %p114 = scmp.ne.s32.totalorder %s100, %s101
      %p115 = scmp.eq.s32.totalorder %s20, 1
      %p116 = por %p114, %p115
      %p118 = scmp.ne.s32.totalorder %s101, %s117
      %p119 = scmp.eq.s32.totalorder %s20, 0
      %p120 = por %p118, %p119
      %p121 = scmp.le.s32.totalorder 1, %s14
      %p122 = scmp.lt.s32.totalorder %s14, 3
      %p123 = pnand %p121, %p122
      %p124 = pneg %p123
      // Predicated region
      $region9: #{tpu_custom_call.1} parent=5 // pred_check
        _
      $region10: #{tpu_custom_call.1} parent=5 // pred_check_branch
        %126 = sbr.rel (%p123) target = $region12
      $region11: #{tpu_custom_call.1} parent=5 // pred_region
        %s127 = ssub.s32 %s14, 1
        // Predicated region
        $region13: #{tpu_custom_call.1} parent=11 // pred_check
          %p128 = pneg %p61
        $region14: #{tpu_custom_call.1} parent=11 // pred_check_branch
          %130 = sbr.rel (%p128) target = $region16
        $region15: #{tpu_custom_call.1} parent=11 // pred_region
          %132 = vsyncadd [#allocation5], 0
          %s134 = sshll.u32 %s1, 4
          %s135 = int_to_ptr.hbm [resolvable:$true] %s134
          %137 = dma.hbm_to_smem %s135, 16, [#allocation6], [#allocation5]
        $region16: #{tpu_custom_call.1} parent=11 // pred_fallthru
          _
      $region12: #{tpu_custom_call.1} parent=5 // pred_fallthru
        _
      %p138 = scmp.lt.s32.totalorder %s14, 2
      // Predicated region
      $region17: #{tpu_custom_call.1} parent=5 // pred_check
        %p139 = pneg %p138
      $region18: #{tpu_custom_call.1} parent=5 // pred_check_branch
        %141 = sbr.rel (%p139) target = $region20
      $region19: #{tpu_custom_call.1} parent=5 // pred_region
        // Predicated region
        $region21: #{tpu_custom_call.1} parent=19 // pred_check
          %p142 = pneg %p34
        $region22: #{tpu_custom_call.1} parent=19 // pred_check_branch
          %144 = sbr.rel (%p142) target = $region24
        $region23: #{tpu_custom_call.1} parent=19 // pred_region
          %s145 = sand.u32 %s24, 1
          %s146 = scalar_lea.sflag [#allocation4], %s145
          %s147 = sand.u32 %s24, 1
          %s148 = smul.addr %s147, 2
          %s149 = scalar_lea.vmem [#allocation3], %s148
          %151 = vsyncadd %s146, 0
          %s152 = smul.addr %s14, 2
          %s153 = scalar_lea.hbm %s0, %s152
          %s155 = sshll.u32 %s153, 4
          %s156 = int_to_ptr.hbm [resolvable:$true] %s155
          %s157 = sshll.u32 %s149, 4
          %s158 = int_to_ptr.vmem [resolvable:$true] %s157
          %160 = dma.hbm_to_vmem [thread:$0]  %s156, 32, %s158, %s146
        $region24: #{tpu_custom_call.1} parent=19 // pred_fallthru
          _
      $region20: #{tpu_custom_call.1} parent=5 // pred_fallthru
        _
      %p161 = scmp.le.s32.totalorder 1, %s14
      %p162 = scmp.lt.s32.totalorder %s14, 3
      %p163 = pnand %p161, %p162
      %p164 = pneg %p163
      // Predicated region
      $region25: #{tpu_custom_call.1} parent=5 // pred_check
        _
      $region26: #{tpu_custom_call.1} parent=5 // pred_check_branch
        %166 = sbr.rel (%p163) target = $region28
      $region27: #{tpu_custom_call.1} parent=5 // pred_region
        %s167 = ssub.s32 %s14, 1
        %s168 = sand.u32 %s27, 1
        %s169 = scalar_lea.sflag [#allocation4], %s168
        %s170 = sand.u32 %s27, 1
        %s171 = smul.addr %s170, 2
        %s172 = scalar_lea.vmem [#allocation3], %s171
        // Predicated region
        $region29: #{tpu_custom_call.1} parent=27 // pred_check
          %p173 = pneg %p40
        $region30: #{tpu_custom_call.1} parent=27 // pred_check_branch
          %175 = sbr.rel (%p173) target = $region32
        $region31: #{tpu_custom_call.1} parent=27 // pred_region
          %177 = dma.done %s169, 32
        $region32: #{tpu_custom_call.1} parent=27 // pred_fallthru
          _
        // Predicated region
        $region33: #{tpu_custom_call.1} parent=27 // pred_check
          %p178 = pneg %p61
        $region34: #{tpu_custom_call.1} parent=27 // pred_check_branch
          %180 = sbr.rel (%p178) target = $region36
        $region35: #{tpu_custom_call.1} parent=27 // pred_region
          %182 = dma.done [#allocation5], 16
        $region36: #{tpu_custom_call.1} parent=27 // pred_fallthru
          _
        %183 = sfence
        %s184 = sand.u32 %s27, 1
        %s185 = scalar_lea.sflag [#allocation4], %s184
        %s186 = sand.u32 %s27, 1
        %s187 = smul.addr %s186, 2
        %s188 = scalar_lea.vmem [#allocation3], %s187
        %p189 = pneg %p40
        %p190 = pneg %p37
        %p191 = pneg %p61
        %p192 = pneg %p58
        %p193 = pneg %p87
        %p194 = pneg %p84
        %p195 = scmp.lt.s32.totalorder %s19, 1
        %s196 = scalar_select %p195, %s19, 1
        %s197 = smul.addr %s196, 2
        %s198 = smul.addr %s197, 4
        %s199 = scalar_lea.vmem %s2, %s198
        %p200 = pneg %p113
        %p201 = pneg %p110
        %p202 = scmp.lt.s32.totalorder %s19, 1
        %s203 = scalar_select %p202, %s19, 1
        %s204 = smul.addr %s203, 8
        %s205 = scalar_lea.vmem %s3, %s204
        %p206 = scmp.lt.s32.totalorder %s19, 1
        %s207 = scalar_select %p206, %s19, 1
        %s208 = smul.addr %s207, 2
        %s209 = smul.addr %s208, 4
        %s210 = scalar_lea.vmem %s2, %s209
        %p211 = scmp.lt.s32.totalorder %s19, 1
        %s212 = scalar_select %p211, %s19, 1
        %s213 = smul.addr %s212, 8
        %s214 = scalar_lea.vmem %s3, %s213
        %v215 = vlaneseq
        %vm216 = vcmp.ge.s32.totalorder %v215, 0
        %vm217 = vcmp.lt.s32.totalorder %v215, 17
        %vm218 = vmand %vm216, %vm217
        %219 = vst.msk [vmem:[#allocation2] sm:$0x1] %vm218, 0.0
        %vm220 = vcmp.ge.s32.totalorder %v215, 17
        %vm221 = vcmp.lt.s32.totalorder %v215, 34
        %vm222 = vmand %vm220, %vm221
        %223 = vst.msk [vmem:[#allocation2 + $0x2] sm:$0x1] %vm222, 0.0
        %v224 = vld [vmem:[%s172] sm:$0x3]
        %226 = vrot.lane.b32.xlu0 %v224, 17
        %v227 = vpop.permute.xlu0 %226
        %v228 = vrot.slane %v227, 7
        %vm229 = vcmask 138240
        %v230 = vsel %vm229, %v228, %v227
        %vm232 = vcmp.lt.s32.totalorder %v215, 273
        %vm233 = vmand %vm220, %vm232
        %234 = vst.msk [vmem:[#allocation2] sm:$0x7] %vm233, %v230
        %v235 = vlaneseq
        %v236 = vand.u32 %v235, 127
        %v237 = vadd.s32 %v236, 128
        %vm238 = vcmp.lt.s32.totalorder %v236, 0
        %v239 = vsub.s32 0, %v236
        %v240 = vsel %vm238, %v239, %v236
        %v241 = vshrl.u32 %v240, 4
        %v242 = vand.u32 %v240, 15
        %v243 = vsub.s32 0, %v242
        %v244 = vsel %vm238, %v243, %v242
        %vm245 = vcmp.lt.s32.totalorder %v237, 0
        %v246 = vsub.s32 0, %v237
        %v247 = vsel %vm245, %v246, %v237
        %v248 = vshrl.u32 %v247, 4
        %v249 = vand.u32 %v247, 15
        %v250 = vsub.s32 0, %v249
        %v251 = vsel %vm245, %v250, %v249
        %vm252 = vcmp.ne.s32.totalorder %v244, 0
        %vm253 = vcmp.ne.s32.totalorder %v251, 0
        %vm254 = vcmp.lt.s32.totalorder %v244, 0
        %vm255 = vcmp.lt.s32.totalorder %v251, 0
        %vm256 = vmand %vm254, %vm252
        %vm257 = vmand %vm255, %vm253
        %v258 = vadd.s32 %v244, 16
        %v259 = vadd.s32 %v251, 16
        %v260 = vsel %vm256, %v258, %v244
        %v261 = vsel %vm257, %v259, %v251
        %v262 = vadd.s32 %v260, 4294967295
        %v263 = vadd.s32 %v261, 4294967295
        %vm264 = vcmp.ge.s32.totalorder %v262, 0
        %vm265 = vcmp.ge.s32.totalorder %v263, 0
        %vm266 = vcmp.lt.s32.totalorder %v262, 16
        %vm267 = vcmp.lt.s32.totalorder %v263, 16
        %vm268 = vmand %vm264, %vm266
        %vm269 = vmand %vm265, %vm267
        %v270 = vsel %vm268, 1, 0
        %v271 = vsel %vm269, 1, 0
        %v272 = vcvt.s32.f32 %v270
        %v273 = vcvt.s32.f32 %v271
        %v274 = vadd.s32 %v260, 1
        %v275 = vadd.s32 %v261, 1
        %vm276 = vcmp.ge.s32.totalorder %v274, 0
        %vm277 = vcmp.ge.s32.totalorder %v275, 0
        %vm278 = vcmp.lt.s32.totalorder %v274, 16
        %vm279 = vcmp.lt.s32.totalorder %v275, 16
        %vm280 = vmand %vm276, %vm278
        %vm281 = vmand %vm277, %vm279
        %v282 = vsel %vm280, 1, 0
        %v283 = vsel %vm281, 1, 0
        %v284 = vcvt.s32.f32 %v282
        %v285 = vcvt.s32.f32 %v283
        %v286 = vld [vmem:[#allocation2] sm:$0x3]
        %v289 = vrot.slane %v273, 7
        %vm290 = vcmask 1040384
        %v291 = vsel %vm290, %v272, %v289
        %v293 = vmul.f32 %v286, %v291
        %s294 = sld [smem:[#allocation6]]
        %v295 = vstv %s294
        %v296 = vmul.f32 %v295, %v293
        %v297 = vadd.f32 %v296, 0.0
        %s298 = sld [smem:[#allocation6 + $0x9]]
        %v299 = vstv %s298
        %v300 = vmul.f32 %v299, %v293
        %v301 = vadd.f32 %v300, 0.0
        %s302 = sld [smem:[#allocation6 + $0x12]]
        %v303 = vstv %s302
        %v304 = vmul.f32 %v303, %v293
        %v305 = vadd.f32 %v304, 0.0
        %v306 = vld [vmem:[#allocation2] sm:$0x7]
        %s307 = sld [smem:[#allocation6 + $0x1]]
        %v308 = vstv %s307
        %v309 = vmul.f32 %v308, %v306
        %311 = vrot.lane.b32.xlu0 %v309, 127
        %v312 = vpop.permute.xlu0 %311
        %v313 = vrot.slane %v312, 1
        %vm314 = vcmask 1039360
        %v315 = vsel %vm314, %v312, %v313
        %v317 = vadd.f32 %v297, %v315
        %s318 = sld [smem:[#allocation6 + $0xa]]
        %v319 = vstv %s318
        %v320 = vmul.f32 %v319, %v306
        %322 = vrot.lane.b32.xlu0 %v320, 127
        %v323 = vpop.permute.xlu0 %322
        %v324 = vrot.slane %v323, 1
        %v325 = vsel %vm314, %v323, %v324
        %v327 = vadd.f32 %v301, %v325
        %s328 = sld [smem:[#allocation6 + $0x13]]
        %v329 = vstv %s328
        %v330 = vmul.f32 %v329, %v306
        %332 = vrot.lane.b32.xlu0 %v330, 127
        %v333 = vpop.permute.xlu0 %332
        %v334 = vrot.slane %v333, 1
        %v335 = vsel %vm314, %v333, %v334
        %v337 = vadd.f32 %v305, %v335
        %v340 = vrot.slane %v285, 7
        %v341 = vsel %vm290, %v284, %v340
        %342 = vrot.lane.b32.xlu0 %v341, 2
        %v343 = vpop.permute.xlu0 %342
        %v344 = vrot.slane %v343, 7
        %vm345 = vcmask 15360
        %v346 = vsel %vm345, %v344, %v343
        %v348 = vmul.f32 %v306, %v346
        %s349 = sld [smem:[#allocation6 + $0x2]]
        %v350 = vstv %s349
        %v351 = vmul.f32 %v350, %v348
        %353 = vrot.lane.b32.xlu0 %v351, 126
        %v354 = vpop.permute.xlu0 %353
        %v355 = vrot.slane %v354, 1
        %vm356 = vcmask 1031168
        %v357 = vsel %vm356, %v354, %v355
        %v359 = vadd.f32 %v317, %v357
        %s360 = sld [smem:[#allocation6 + $0xb]]
        %v361 = vstv %s360
        %v362 = vmul.f32 %v361, %v348
        %364 = vrot.lane.b32.xlu0 %v362, 126
        %v365 = vpop.permute.xlu0 %364
        %v366 = vrot.slane %v365, 1
        %v367 = vsel %vm356, %v365, %v366
        %v369 = vadd.f32 %v327, %v367
        %s370 = sld [smem:[#allocation6 + $0x14]]
        %v371 = vstv %s370
        %v372 = vmul.f32 %v371, %v348
        %374 = vrot.lane.b32.xlu0 %v372, 126
        %v375 = vpop.permute.xlu0 %374
        %v376 = vrot.slane %v375, 1
        %v377 = vsel %vm356, %v375, %v376
        %v379 = vadd.f32 %v337, %v377
        %380 = vrot.lane.b32.xlu0 %v291, 16
        %v381 = vpop.permute.xlu0 %380
        %v382 = vrot.slane %v381, 7
        %vm383 = vcmask 130048
        %v384 = vsel %vm383, %v382, %v381
        %v386 = vmul.f32 %v306, %v384
        %s387 = sld [smem:[#allocation6 + $0x3]]
        %v388 = vstv %s387
        %v389 = vmul.f32 %v388, %v386
        %391 = vrot.lane.b32.xlu0 %v389, 112
        %v392 = vpop.permute.xlu0 %391
        %v393 = vrot.slane %v392, 1
        %vm394 = vcmask 916480
        %v395 = vsel %vm394, %v392, %v393
        %v397 = vadd.f32 %v359, %v395
        %s398 = sld [smem:[#allocation6 + $0xc]]
        %v399 = vstv %s398
        %v400 = vmul.f32 %v399, %v386
        %402 = vrot.lane.b32.xlu0 %v400, 112
        %v403 = vpop.permute.xlu0 %402
        %v404 = vrot.slane %v403, 1
        %v405 = vsel %vm394, %v403, %v404
        %v407 = vadd.f32 %v369, %v405
        %s408 = sld [smem:[#allocation6 + $0x15]]
        %v409 = vstv %s408
        %v410 = vmul.f32 %v409, %v386
        %412 = vrot.lane.b32.xlu0 %v410, 112
        %v413 = vpop.permute.xlu0 %412
        %v414 = vrot.slane %v413, 1
        %v415 = vsel %vm394, %v413, %v414
        %v417 = vadd.f32 %v379, %v415
        %s418 = sld [smem:[#allocation6 + $0x4]]
        %v419 = vstv %s418
        %v420 = vmul.f32 %v419, %v306
        %422 = vrot.lane.b32.xlu0 %v420, 111
        %v423 = vpop.permute.xlu0 %422
        %v424 = vrot.slane %v423, 1
        %vm425 = vcmask 908288
        %v426 = vsel %vm425, %v423, %v424
        %v428 = vadd.f32 %v397, %v426
        %s429 = sld [smem:[#allocation6 + $0xd]]
        %v430 = vstv %s429
        %v431 = vmul.f32 %v430, %v306
        %433 = vrot.lane.b32.xlu0 %v431, 111
        %v434 = vpop.permute.xlu0 %433
        %v435 = vrot.slane %v434, 1
        %v436 = vsel %vm425, %v434, %v435
        %v438 = vadd.f32 %v407, %v436
        %s439 = sld [smem:[#allocation6 + $0x16]]
        %v440 = vstv %s439
        %v441 = vmul.f32 %v440, %v306
        %443 = vrot.lane.b32.xlu0 %v441, 111
        %v444 = vpop.permute.xlu0 %443
        %v445 = vrot.slane %v444, 1
        %v446 = vsel %vm425, %v444, %v445
        %v448 = vadd.f32 %v417, %v446
        %449 = vrot.lane.b32.xlu0 %v341, 18
        %v450 = vpop.permute.xlu0 %449
        %v451 = vrot.slane %v450, 7
        %vm452 = vcmask 146432
        %v453 = vsel %vm452, %v451, %v450
        %v455 = vmul.f32 %v306, %v453
        %s456 = sld [smem:[#allocation6 + $0x5]]
        %v457 = vstv %s456
        %v458 = vmul.f32 %v457, %v455
        %460 = vrot.lane.b32.xlu0 %v458, 110
        %v461 = vpop.permute.xlu0 %460
        %v462 = vrot.slane %v461, 1
        %vm463 = vcmask 900096
        %v464 = vsel %vm463, %v461, %v462
        %v466 = vadd.f32 %v428, %v464
        %s467 = sld [smem:[#allocation6 + $0xe]]
        %v468 = vstv %s467
        %v469 = vmul.f32 %v468, %v455
        %471 = vrot.lane.b32.xlu0 %v469, 110
        %v472 = vpop.permute.xlu0 %471
        %v473 = vrot.slane %v472, 1
        %v474 = vsel %vm463, %v472, %v473
        %v476 = vadd.f32 %v438, %v474
        %s477 = sld [smem:[#allocation6 + $0x17]]
        %v478 = vstv %s477
        %v479 = vmul.f32 %v478, %v455
        %481 = vrot.lane.b32.xlu0 %v479, 110
        %v482 = vpop.permute.xlu0 %481
        %v483 = vrot.slane %v482, 1
        %v484 = vsel %vm463, %v482, %v483
        %v486 = vadd.f32 %v448, %v484
        %487 = vrot.lane.b32.xlu0 %v291, 32
        %v488 = vpop.permute.xlu0 %487
        %v489 = vrot.slane %v488, 7
        %vm490 = vcmask 261120
        %v491 = vsel %vm490, %v489, %v488
        %v493 = vmul.f32 %v306, %v491
        %s494 = sld [smem:[#allocation6 + $0x6]]
        %v495 = vstv %s494
        %v496 = vmul.f32 %v495, %v493
        %498 = vrot.lane.b32.xlu0 %v496, 96
        %v499 = vpop.permute.xlu0 %498
        %v500 = vrot.slane %v499, 1
        %vm501 = vcmask 785408
        %v502 = vsel %vm501, %v499, %v500
        %v504 = vadd.f32 %v466, %v502
        %s505 = sld [smem:[#allocation6 + $0xf]]
        %v506 = vstv %s505
        %v507 = vmul.f32 %v506, %v493
        %509 = vrot.lane.b32.xlu0 %v507, 96
        %v510 = vpop.permute.xlu0 %509
        %v511 = vrot.slane %v510, 1
        %v512 = vsel %vm501, %v510, %v511
        %v514 = vadd.f32 %v476, %v512
        %s515 = sld [smem:[#allocation6 + $0x18]]
        %v516 = vstv %s515
        %v517 = vmul.f32 %v516, %v493
        %519 = vrot.lane.b32.xlu0 %v517, 96
        %v520 = vpop.permute.xlu0 %519
        %v521 = vrot.slane %v520, 1
        %v522 = vsel %vm501, %v520, %v521
        %v524 = vadd.f32 %v486, %v522
        %s525 = sld [smem:[#allocation6 + $0x7]]
        %v526 = vstv %s525
        %v527 = vmul.f32 %v526, %v306
        %529 = vrot.lane.b32.xlu0 %v527, 95
        %v530 = vpop.permute.xlu0 %529
        %v531 = vrot.slane %v530, 1
        %vm532 = vcmask 777216
        %v533 = vsel %vm532, %v530, %v531
        %v535 = vadd.f32 %v504, %v533
        %s536 = sld [smem:[#allocation6 + $0x10]]
        %v537 = vstv %s536
        %v538 = vmul.f32 %v537, %v306
        %540 = vrot.lane.b32.xlu0 %v538, 95
        %v541 = vpop.permute.xlu0 %540
        %v542 = vrot.slane %v541, 1
        %v543 = vsel %vm532, %v541, %v542
        %v545 = vadd.f32 %v514, %v543
        %s546 = sld [smem:[#allocation6 + $0x19]]
        %v547 = vstv %s546
        %v548 = vmul.f32 %v547, %v306
        %550 = vrot.lane.b32.xlu0 %v548, 95
        %v551 = vpop.permute.xlu0 %550
        %v552 = vrot.slane %v551, 1
        %v553 = vsel %vm532, %v551, %v552
        %v555 = vadd.f32 %v524, %v553
        %556 = vrot.lane.b32.xlu0 %v341, 34
        %v557 = vpop.permute.xlu0 %556
        %v558 = vrot.slane %v557, 7
        %vm559 = vcmask 277504
        %v560 = vsel %vm559, %v558, %v557
        %v562 = vmul.f32 %v306, %v560
        %s563 = sld [smem:[#allocation6 + $0x8]]
        %v564 = vstv %s563
        %v565 = vmul.f32 %v564, %v562
        %567 = vrot.lane.b32.xlu0 %v565, 94
        %v568 = vpop.permute.xlu0 %567
        %v569 = vrot.slane %v568, 1
        %vm570 = vcmask 769024
        %v571 = vsel %vm570, %v568, %v569
        %v573 = vadd.f32 %v535, %v571
        %s574 = sld [smem:[#allocation6 + $0x11]]
        %v575 = vstv %s574
        %v576 = vmul.f32 %v575, %v562
        %578 = vrot.lane.b32.xlu0 %v576, 94
        %v579 = vpop.permute.xlu0 %578
        %v580 = vrot.slane %v579, 1
        %v581 = vsel %vm570, %v579, %v580
        %v583 = vadd.f32 %v545, %v581
        %s584 = sld [smem:[#allocation6 + $0x1a]]
        %v585 = vstv %s584
        %v586 = vmul.f32 %v585, %v562
        %588 = vrot.lane.b32.xlu0 %v586, 94
        %v589 = vpop.permute.xlu0 %588
        %v590 = vrot.slane %v589, 1
        %v591 = vsel %vm570, %v589, %v590
        %v593 = vadd.f32 %v555, %v591
        %vm594 = vcmp.lt.s32.totalorder %v215, 256
        %vm595 = vmand %vm216, %vm594
        %596 = vst.msk [vmem:[%s210] ss:$4 sm:$0x3] %vm595, %v573
        %v598 = vperm.slane %v573, 0
        %v599 = vperm.slane %v573, 1
        %v602 = vsel %vm290, %v598, 0.0
        %v603 = vsel %vm290, %v599, 0.0
        %v604 = vadd.f32 %v602, %v603
        %605 = vadd.xlane.f32.xlu0 %v604
        %v606 = vpop.xlane.xlu0 %605
        %v607 = vrot.slane %v606, 4
        %v608 = vadd.f32 %v606, %v607
        %v609 = vrot.slane %v608, 2
        %v610 = vadd.f32 %v608, %v609
        %v611 = vrot.slane %v610, 1
        %v612 = vadd.f32 %v610, %v611
        %s613 = vtos %v612
        %v614 = vstv %s613
        %615 = vst [vmem:[%s214] sm:$0x1] %v614
        %v616 = vmul.f32 %v573, %v573
        %v618 = vperm.slane %v616, 0
        %v619 = vperm.slane %v616, 1
        %v622 = vsel %vm290, %v618, 0.0
        %v623 = vsel %vm290, %v619, 0.0
        %v624 = vadd.f32 %v622, %v623
        %625 = vadd.xlane.f32.xlu0 %v624
        %v626 = vpop.xlane.xlu0 %625
        %v627 = vrot.slane %v626, 4
        %v628 = vadd.f32 %v626, %v627
        %v629 = vrot.slane %v628, 2
        %v630 = vadd.f32 %v628, %v629
        %v631 = vrot.slane %v630, 1
        %v632 = vadd.f32 %v630, %v631
        %s633 = vtos %v632
        %v634 = vstv %s633
        %635 = vst [vmem:[%s214 + $0x3] sm:$0x1] %v634
        %s636 = scalar_lea.vmem %s210, 1
        %637 = vst.msk [vmem:[%s636] ss:$4 sm:$0x3] %vm595, %v583
        %v639 = vperm.slane %v583, 0
        %v640 = vperm.slane %v583, 1
        %v643 = vsel %vm290, %v639, 0.0
        %v644 = vsel %vm290, %v640, 0.0
        %v645 = vadd.f32 %v643, %v644
        %646 = vadd.xlane.f32.xlu0 %v645
        %v647 = vpop.xlane.xlu0 %646
        %v648 = vrot.slane %v647, 4
        %v649 = vadd.f32 %v647, %v648
        %v650 = vrot.slane %v649, 2
        %v651 = vadd.f32 %v649, %v650
        %v652 = vrot.slane %v651, 1
        %v653 = vadd.f32 %v651, %v652
        %s654 = vtos %v653
        %v655 = vstv %s654
        %656 = vst [vmem:[%s214 + $0x1] sm:$0x1] %v655
        %v657 = vmul.f32 %v583, %v583
        %v659 = vperm.slane %v657, 0
        %v660 = vperm.slane %v657, 1
        %v663 = vsel %vm290, %v659, 0.0
        %v664 = vsel %vm290, %v660, 0.0
        %v665 = vadd.f32 %v663, %v664
        %666 = vadd.xlane.f32.xlu0 %v665
        %v667 = vpop.xlane.xlu0 %666
        %v668 = vrot.slane %v667, 4
        %v669 = vadd.f32 %v667, %v668
        %v670 = vrot.slane %v669, 2
        %v671 = vadd.f32 %v669, %v670
        %v672 = vrot.slane %v671, 1
        %v673 = vadd.f32 %v671, %v672
        %s674 = vtos %v673
        %v675 = vstv %s674
        %676 = vst [vmem:[%s214 + $0x4] sm:$0x1] %v675
        %s677 = scalar_lea.vmem %s210, 2
        %678 = vst.msk [vmem:[%s677] ss:$4 sm:$0x3] %vm595, %v593
        %v680 = vperm.slane %v593, 0
        %v681 = vperm.slane %v593, 1
        %v684 = vsel %vm290, %v680, 0.0
        %v685 = vsel %vm290, %v681, 0.0
        %v686 = vadd.f32 %v684, %v685
        %687 = vadd.xlane.f32.xlu0 %v686
        %v688 = vpop.xlane.xlu0 %687
        %v689 = vrot.slane %v688, 4
        %v690 = vadd.f32 %v688, %v689
        %v691 = vrot.slane %v690, 2
        %v692 = vadd.f32 %v690, %v691
        %v693 = vrot.slane %v692, 1
        %v694 = vadd.f32 %v692, %v693
        %s695 = vtos %v694
        %v696 = vstv %s695
        %697 = vst [vmem:[%s214 + $0x2] sm:$0x1] %v696
        %v698 = vmul.f32 %v593, %v593
        %v700 = vperm.slane %v698, 0
        %v701 = vperm.slane %v698, 1
        %v704 = vsel %vm290, %v700, 0.0
        %v705 = vsel %vm290, %v701, 0.0
        %v706 = vadd.f32 %v704, %v705
        %707 = vadd.xlane.f32.xlu0 %v706
        %v708 = vpop.xlane.xlu0 %707
        %v709 = vrot.slane %v708, 4
        %v710 = vadd.f32 %v708, %v709
        %v711 = vrot.slane %v710, 2
        %v712 = vadd.f32 %v710, %v711
        %v713 = vrot.slane %v712, 1
        %v714 = vadd.f32 %v712, %v713
        %s715 = vtos %v714
        %v716 = vstv %s715
        %717 = vst [vmem:[%s214 + $0x5] sm:$0x1] %v716
        %p718 = scmp.lt.s32.totalorder %s19, 1
        %s719 = scalar_select %p718, %s19, 1
        %s720 = smul.addr %s719, 2
        %s721 = smul.addr %s720, 4
        %s722 = scalar_lea.vmem %s2, %s721
        %p723 = scmp.lt.s32.totalorder %s19, 1
        %s724 = scalar_select %p723, %s19, 1
        %s725 = smul.addr %s724, 8
        %s726 = scalar_lea.vmem %s3, %s725
        // Predicated region
        $region37: #{tpu_custom_call.1} parent=27 // pred_check
          %p727 = pneg %p84
        $region38: #{tpu_custom_call.1} parent=27 // pred_check_branch
          %729 = sbr.rel (%p727) target = $region40
        $region39: #{tpu_custom_call.1} parent=27 // pred_region
          _
        $region40: #{tpu_custom_call.1} parent=27 // pred_fallthru
          _
        // Predicated region
        $region41: #{tpu_custom_call.1} parent=27 // pred_check
          %p730 = pneg %p110
        $region42: #{tpu_custom_call.1} parent=27 // pred_check_branch
          %732 = sbr.rel (%p730) target = $region44
        $region43: #{tpu_custom_call.1} parent=27 // pred_region
          _
        $region44: #{tpu_custom_call.1} parent=27 // pred_fallthru
          _
      $region28: #{tpu_custom_call.1} parent=5 // pred_fallthru
        _
      %p733 = scmp.le.s32.totalorder 2, %s14
      // Predicated region
      $region45: #{tpu_custom_call.1} parent=5 // pred_check
        %p734 = pneg %p733
      $region46: #{tpu_custom_call.1} parent=5 // pred_check_branch
        %736 = sbr.rel (%p734) target = $region48
      $region47: #{tpu_custom_call.1} parent=5 // pred_region
        %s737 = ssub.s32 %s14, 2
        // Predicated region
        $region49: #{tpu_custom_call.1} parent=47 // pred_check
          %p738 = pneg %p90
        $region50: #{tpu_custom_call.1} parent=47 // pred_check_branch
          %740 = sbr.rel (%p738) target = $region52
        $region51: #{tpu_custom_call.1} parent=47 // pred_region
          %p741 = scmp.lt.s32.totalorder %s20, 1
          %s742 = scalar_select %p741, %s20, 1
          %s743 = smul.addr %s742, 2
          %s744 = smul.addr %s743, 4
          %s745 = scalar_lea.vmem %s2, %s744
        $region52: #{tpu_custom_call.1} parent=47 // pred_fallthru
          _
        // Predicated region
        $region53: #{tpu_custom_call.1} parent=47 // pred_check
          %p746 = pneg %p116
        $region54: #{tpu_custom_call.1} parent=47 // pred_check_branch
          %748 = sbr.rel (%p746) target = $region56
        $region55: #{tpu_custom_call.1} parent=47 // pred_region
          %p749 = scmp.lt.s32.totalorder %s20, 1
          %s750 = scalar_select %p749, %s20, 1
          %s751 = smul.addr %s750, 8
          %s752 = scalar_lea.vmem %s3, %s751
        $region56: #{tpu_custom_call.1} parent=47 // pred_fallthru
          _
      $region48: #{tpu_custom_call.1} parent=5 // pred_fallthru
        _
    $region6: #{tpu_custom_call.1} parent=1 // loop_footer
      %s18 = sadd.s32 1, %s14
    $region7: #{tpu_custom_call.1} parent=1 // loop_footer_branch
      %13 = sbr.rel target = $region3
    $region8: #{tpu_custom_call.1} parent=1 // loop_exit
      _
    %753 = vsyncpa [#allocation4], 1
    %s754 = scalar_lea.sflag [#allocation4], 1
    %755 = vsyncpa %s754, 1
    %756 = vsyncpa [#allocation5], 1
    %s757 = scalar_lea.sflag [#allocation5], 1
    %758 = vsyncpa %s757, 1

</llo_original>
